<compile_context>
chip_gen: v7x
topology: tpu7x:2x2x1
jax: 0.10.0
libtpu: 0.0.40
codegen_flags: <defaults>
</compile_context>

<pallas_src>
import jax
import jax.numpy as jnp
from jax.experimental import pallas as pl
from jax.experimental.pallas import tpu as pltpu


# --------------------------------------------------------------------------
# DDPM noise schedules (plain JAX port of `schedules(..., type='DDPM')`)
# --------------------------------------------------------------------------
def ddpm_schedule(beta1, beta2, T):
    assert 0.0 < beta1 < beta2 < 1.0
    beta_t = jnp.concatenate(
        [jnp.array([0.0], dtype=jnp.float32), jnp.linspace(beta1, beta2, T)]
    )
    sqrt_beta_t = jnp.sqrt(beta_t)
    alpha_t = 1.0 - beta_t
    log_alpha_t = jnp.log(alpha_t)
    alphabar_t = jnp.exp(jnp.cumsum(log_alpha_t))
    sqrtab = jnp.sqrt(alphabar_t)
    oneover_sqrta = 1.0 / jnp.sqrt(alpha_t)
    sqrtmab = jnp.sqrt(1.0 - alphabar_t)
    ma_over_sqrtmab = (1.0 - alpha_t) / sqrtmab
    return dict(
        alpha_t=alpha_t,
        oneover_sqrta=oneover_sqrta,
        sqrt_beta_t=sqrt_beta_t,
        alphabar_t=alphabar_t,
        sqrtab=sqrtab,
        sqrtmab=sqrtmab,
        ma_over_sqrtmab=ma_over_sqrtmab,
    )


# --------------------------------------------------------------------------
# Tiling heuristics
# --------------------------------------------------------------------------
def _pick_batch_tile(B, C):
    """Smallest divisor Bt of B with Bt*C >= 8 (fills the f32 sublanes) while
    keeping B//Bt >= 2 so the 'parallel' batch-tile axis still feeds both v7x
    TensorCores.  Falls back to 1 (e.g. B=2, C=4)."""
    for bt in range(1, B + 1):
        if B % bt == 0 and bt * C >= 8 and B // bt >= 2:
            return bt
    return 1


def _pick_pixel_tile(hw_pad, Bt, C, Dh, budget_bytes=12 << 20):
    """Largest 128-multiple divisor of hw_pad whose per-step footprint
    (double-buffered bf16 x/noise blocks + f32 intermediates) stays under budget.
    Big tiles amortize the ~0.35 us per-grid-step overhead; the 48 MiB
    vmem_limit below leaves ample headroom over this 12 MiB target (v7x-safe)."""
    def step_bytes(t):
        dbuf_inputs = 2 * 2 * Bt * C * t * 2                 # x,noise x 2 bufs, bf16
        f32_interm = (3 * Bt * C + Dh + 2 * C) * t * 4       # upcasts, x_t, h, eps, d
        return dbuf_inputs + f32_interm

    n = hw_pad // 128
    best = 128
    for k in range(1, n + 1):
        if n % k == 0 and step_bytes(k * 128) <= budget_bytes:
            best = k * 128
    return best


# --------------------------------------------------------------------------
# Pallas kernel: forward diffusion + eps-predictor MLP + per-batch-tile SSE partials
# --------------------------------------------------------------------------
def _make_ddpm_loss_kernel(Bt, tile_px, n_px, hw_valid, padded):
    def kernel(
        xs_ref,      # VMEM (Bt, C, 1)       2*sqrtab[ts]  (per-sublane column)
        ns_ref,      # VMEM (Bt, C, 1)       sqrtmab[ts]
        sh_ref,      # VMEM (Bt, C, 1)      -sqrtab[ts]    (folded normalization)
        x_ref,       # VMEM (Bt, C, Tpx)     raw image pixels in [0,1], bf16
        noise_ref,   # VMEM (Bt, C, Tpx)     gaussian noise, bf16
        cond_ref,    # VMEM (Bt, Dh, 1)      per-image conditioning column, f32
        w1t_ref,     # VMEM (Dh, C)          eps-predictor W1^T, bf16 (resident)
        w2t_ref,     # VMEM (C, Dh)          eps-predictor W2^T, bf16 (resident)
        b2_ref,      # VMEM (C, 1)           output bias column, f32
        psum_ref,    # OUT  (1, 1, 128)      per-batch-tile lane-dense SSE partial
    ):
        p = pl.program_id(1)   # pixel-tile index (innermost, "arbitrary")

        # bf16 HBM streams -> f32 for elementwise math (v5e-safe)
        x = x_ref[...].astype(jnp.float32)            # (Bt, C, Tpx)
        noise = noise_ref[...].astype(jnp.float32)    # (Bt, C, Tpx)

        # forward diffusion with the [0,1]->[-1,1] normalization folded in:
        #   x_t = sqrtab*(2x-1) + sqrtmab*noise = (2*sqrtab)*x + sqrtmab*noise - sqrtab
        # coefficient columns are (Bt, C, 1) -> lane-only broadcast.
        x_t = xs_ref[...] * x + ns_ref[...] * noise + sh_ref[...]
        x_t_bf = x_t.astype(jnp.bfloat16)

        w1t = w1t_ref[...]     # (Dh, C) bf16
        w2t = w2t_ref[...]     # (C, Dh) bf16
        b2 = b2_ref[...]       # (C, 1)  f32

        # synthetic nn_model(x_t, t, c, mask): per-pixel conditional MLP, computed
        # transposed so the MXU output columns are the (>=128) pixel lanes.
        part = None
        for bi in range(Bt):   # static unroll over the images stacked in this block
            h = jnp.dot(w1t, x_t_bf[bi], preferred_element_type=jnp.float32)  # (Dh,Tpx)
            h = jnp.maximum(h + cond_ref[bi], 0.0)                            # (Dh,1) bcast
            eps = jnp.dot(w2t, h.astype(jnp.bfloat16),
                          preferred_element_type=jnp.float32)                 # (C, Tpx)
            eps = eps + b2                                                    # (C,1) bcast
            d = noise[bi] - eps
            sse = jnp.sum(d * d, axis=0, keepdims=True)                       # (1, Tpx)
            part = sse if part is None else part + sse

        if padded:
            # zero the contribution of the zero-padded pixel lanes
            lane = jax.lax.broadcasted_iota(jnp.int32, (1, tile_px), 1)
            part = jnp.where(p * tile_px + lane < hw_valid, part, 0.0)

        # fold the (1, Tpx) partial into a lane-dense (1, 128) vector (aligned slices)
        acc = part[:, 0:128]
        for k in range(1, tile_px // 128):
            acc = acc + part[:, k * 128:(k + 1) * 128]

        if n_px == 1:
            psum_ref[...] = acc[None]          # single pixel tile: plain store
        else:
            # pixel-tile axis revisits this output block: init at p==0, accumulate.
            @pl.when(p == 0)
            def _():
                psum_ref[...] = jnp.zeros_like(psum_ref)
            psum_ref[...] += acc[None]

    return kernel


def ddpm_loss_pallas(x3, noise3, xscale, nscale, xshift, cond, w1t, w2t, b2col,
                     *, hw_valid):
    """x3/noise3: (B, C, HWp) bf16 (HWp = HW padded up to a multiple of 128);
    xscale/nscale/xshift: (B, C, 1) f32 coefficient columns (2*sqrtab, sqrtmab,
    -sqrtab); cond: (B, Dh, 1) f32; w1t: (Dh, C) bf16; w2t: (C, Dh) bf16;
    b2col: (C, 1) f32.  Returns the scalar MSE loss (mean over B*C*hw_valid)."""
    B, C, HWp = x3.shape
    Dh = w1t.shape[0]
    assert HWp % 128 == 0

    Bt = _pick_batch_tile(B, C)
    n_bt = B // Bt
    tile_px = _pick_pixel_tile(HWp, Bt, C, Dh)
    n_px = HWp // tile_px
    padded = HWp != hw_valid

    kernel = _make_ddpm_loss_kernel(Bt, tile_px, n_px, hw_valid, padded)

    partials = pl.pallas_call(
        kernel,
        out_shape=jax.ShapeDtypeStruct((n_bt, 1, 128), jnp.float32),
        # NOTE: the pixel-tile axis MUST stay innermost and "arbitrary" — the output
        # block index is constant over it (accumulator). Reordering the grid or
        # marking it "parallel" would silently corrupt the partial sums.
        grid=(n_bt, n_px),
        in_specs=[
            pl.BlockSpec((Bt, C, 1), lambda b, p: (b, 0, 0)),         # 2*sqrtab col
            pl.BlockSpec((Bt, C, 1), lambda b, p: (b, 0, 0)),         # sqrtmab col
            pl.BlockSpec((Bt, C, 1), lambda b, p: (b, 0, 0)),         # -sqrtab col
            pl.BlockSpec((Bt, C, tile_px), lambda b, p: (b, 0, p)),   # x (bf16)
            pl.BlockSpec((Bt, C, tile_px), lambda b, p: (b, 0, p)),   # noise (bf16)
            pl.BlockSpec((Bt, Dh, 1), lambda b, p: (b, 0, 0)),        # cond column
            pl.BlockSpec((Dh, C), lambda b, p: (0, 0)),               # w1^T (resident)
            pl.BlockSpec((C, Dh), lambda b, p: (0, 0)),               # w2^T (resident)
            pl.BlockSpec((C, 1), lambda b, p: (0, 0)),                # b2 column
        ],
        out_specs=pl.BlockSpec((1, 1, 128), lambda b, p: (b, 0, 0)),
        compiler_params=pltpu.CompilerParams(
            # batch-tile axis independent (megacore on v7x); pixel-tile axis
            # revisits the per-batch-tile accumulator block -> "arbitrary".
            dimension_semantics=("parallel", "arbitrary"),
            # explicit VMEM budget: above the 32 MiB scoped default, inside v7x's
            # 64 MiB physical VMEM; the 12 MiB/step tile budget leaves headroom.
            vmem_limit_bytes=48 * 1024 * 1024,
        ),
    )(xscale, nscale, xshift, x3, noise3, cond, w1t, w2t, b2col)

    # tiny final reduce + MSE mean over the UNpadded element count
    return jnp.sum(partials) * (1.0 / float(B * C * hw_valid))


# --------------------------------------------------------------------------
# DDPM.forward wrapper (glue: RNG draws, schedule gather, layout, cond embed)
# --------------------------------------------------------------------------
def ddpm_forward(x, c, params, sche, key, *, n_T, drop_prob, n_classes):
    B, C, H, W = x.shape
    HW = H * W
    kts, knoise, kmask = jax.random.split(key, 3)

    # _ts = randint(1, n_T+1, (B,)) ; noise ~ N(0,1) ; mask ~ Bernoulli(drop_prob)
    _ts = jax.random.randint(kts, (B,), 1, n_T + 1)
    noise = jax.random.normal(knoise, x.shape, jnp.float32)
    mask = jax.random.bernoulli(kmask, drop_prob, (B,)).astype(jnp.float32)

    # per-batch diffusion coefficients with the [0,1]->[-1,1] normalization folded
    # in, shaped as (B, C, 1) per-sublane columns (lane-only broadcast in-kernel).
    sab = sche["sqrtab"][_ts].astype(jnp.float32)      # (B,)
    smab = sche["sqrtmab"][_ts].astype(jnp.float32)    # (B,)

    def col(v):
        return jnp.broadcast_to(v[:, None, None], (B, C, 1)).astype(jnp.float32)

    xscale = col(2.0 * sab)
    nscale = col(smab)
    xshift = col(-sab)

    # conditioning: t/n_T embedding + class embedding (dropped where mask==1)
    t_norm = (_ts.astype(jnp.float32) / n_T)[:, None]                 # (B, 1)
    c_emb = jax.nn.one_hot(c, n_classes) * (1.0 - mask)[:, None]      # (B, n_classes)
    cond_b = t_norm @ params["w_t"] + c_emb @ params["w_c"] + params["b1"]  # (B, Dh)
    cond = cond_b[:, :, None].astype(jnp.float32)                     # (B, Dh, 1)

    # layout: NCHW -> (B, C, HW); pixels land on the lane axis (no transpose).
    # Pad the lane axis to a multiple of 128; padded lanes are masked in-kernel.
    HW_pad = ((HW + 127) // 128) * 128
    x3 = x.reshape(B, C, HW)
    noise3 = noise.reshape(B, C, HW)
    if HW_pad != HW:
        pad = ((0, 0), (0, 0), (0, HW_pad - HW))
        x3 = jnp.pad(x3, pad)
        noise3 = jnp.pad(noise3, pad)
    # bf16 HBM streams (halves DMA bytes on the memory-bound path); the kernel
    # upcasts to f32 for elementwise math and accumulates matmuls/SSE in f32.
    x3 = x3.astype(jnp.bfloat16)
    noise3 = noise3.astype(jnp.bfloat16)

    # transposed bf16 weights for the pixels-on-lanes formulation (tiny, glue)
    w1t = params["w1"].T.astype(jnp.bfloat16)      # (Dh, C)
    w2t = params["w2"].T.astype(jnp.bfloat16)      # (C, Dh)
    b2col = params["b2"].T.astype(jnp.float32)     # (C, 1)

    return ddpm_loss_pallas(x3, noise3, xscale, nscale, xshift, cond,
                            w1t, w2t, b2col, hw_valid=HW)


if __name__ == "__main__":
    # small shapes consistent with DDPM.forward on images
    B, C, H, W = 2, 4, 16, 16
    Dh = 32
    n_T = 400
    n_classes = 10
    drop_prob = 0.1
    betas = (1e-4, 0.02)

    key = jax.random.PRNGKey(0)
    kx, kw1, kw2, kwt, kwc, kb2, kfwd = jax.random.split(key, 7)

    # inputs: images in [0,1] (pre-normalization, as in the PyTorch module), labels
    x = jax.random.uniform(kx, (B, C, H, W), jnp.float32)
    c = jnp.arange(B, dtype=jnp.int32) % n_classes

    # deterministic synthetic eps-predictor parameters
    params = dict(
        w1=jax.random.normal(kw1, (C, Dh), jnp.float32) * 0.2,
        w2=jax.random.normal(kw2, (Dh, C), jnp.float32) * 0.2,
        w_t=jax.random.normal(kwt, (1, Dh), jnp.float32) * 0.2,
        w_c=jax.random.normal(kwc, (n_classes, Dh), jnp.float32) * 0.2,
        b1=jnp.zeros((Dh,), jnp.float32),
        b2=jax.random.normal(kb2, (1, C), jnp.float32) * 0.01,
    )

    sche = ddpm_schedule(betas[0], betas[1], n_T)

    loss = ddpm_forward(
        x, c, params, sche, kfwd,
        n_T=n_T, drop_prob=drop_prob, n_classes=n_classes,
    )
    jax.block_until_ready(loss)
    assert loss.shape == () and jnp.isfinite(loss)
    print("KERNEL_OK")
</pallas_src>

<mosaic_0001>
module attributes {stable_mosaic.version = 11 : i64} {
  func.func @kernel(%arg0: i32, %arg1: i32, %arg2: memref<1x4x1xf32, #tpu.memory_space<vmem>>, %arg3: memref<1x4x1xf32, #tpu.memory_space<vmem>>, %arg4: memref<1x4x1xf32, #tpu.memory_space<vmem>>, %arg5: memref<1x4x256xbf16, #tpu.memory_space<vmem>>, %arg6: memref<1x4x256xbf16, #tpu.memory_space<vmem>>, %arg7: memref<1x32x1xf32, #tpu.memory_space<vmem>>, %arg8: memref<32x4xbf16, #tpu.memory_space<vmem>>, %arg9: memref<4x32xbf16, #tpu.memory_space<vmem>>, %arg10: memref<4x1xf32, #tpu.memory_space<vmem>>, %arg11: memref<1x1x128xf32, #tpu.memory_space<vmem>>) attributes {dimension_semantics = [#tpu.dimension_semantics<parallel>, #tpu.dimension_semantics<arbitrary>], iteration_bounds = array<i64: 2, 1>, scalar_prefetch = 0 : i64, scratch_operands = 0 : i64, tpu.core_type = #tpu.core_type<tc>, window_params = [{transform_indices = @transform_0, window_bounds = array<i64: 1, 4, 1>}, {transform_indices = @transform_1, window_bounds = array<i64: 1, 4, 1>}, {transform_indices = @transform_2, window_bounds = array<i64: 1, 4, 1>}, {transform_indices = @transform_3, window_bounds = array<i64: 1, 4, 256>}, {transform_indices = @transform_4, window_bounds = array<i64: 1, 4, 256>}, {transform_indices = @transform_5, window_bounds = array<i64: 1, 32, 1>}, {pipeline_mode = #tpu.pipeline_mode<synchronous>, transform_indices = @transform_6, window_bounds = array<i64: 32, 4>}, {pipeline_mode = #tpu.pipeline_mode<synchronous>, transform_indices = @transform_7, window_bounds = array<i64: 4, 32>}, {pipeline_mode = #tpu.pipeline_mode<synchronous>, transform_indices = @transform_8, window_bounds = array<i64: 4, 1>}, {transform_indices = @transform_9, window_bounds = array<i64: 1, 1, 128>}]} {
    %c0 = arith.constant 0 : index
    %c0_0 = arith.constant 0 : index
    %c0_1 = arith.constant 0 : index
    %0 = vector.load %arg5[%c0, %c0_0, %c0_1] : memref<1x4x256xbf16, #tpu.memory_space<vmem>>, vector<1x4x256xbf16>
    %1 = arith.extf %0 : vector<1x4x256xbf16> to vector<1x4x256xf32>
    %c0_2 = arith.constant 0 : index
    %c0_3 = arith.constant 0 : index
    %c0_4 = arith.constant 0 : index
    %2 = vector.load %arg6[%c0_2, %c0_3, %c0_4] : memref<1x4x256xbf16, #tpu.memory_space<vmem>>, vector<1x4x256xbf16>
    %3 = arith.extf %2 : vector<1x4x256xbf16> to vector<1x4x256xf32>
    %c0_5 = arith.constant 0 : index
    %c0_6 = arith.constant 0 : index
    %c0_7 = arith.constant 0 : index
    %4 = vector.load %arg2[%c0_5, %c0_6, %c0_7] : memref<1x4x1xf32, #tpu.memory_space<vmem>>, vector<1x4x1xf32>
    %5 = vector.broadcast %4 : vector<1x4x1xf32> to vector<1x4x256xf32>
    %6 = arith.mulf %5, %1 : vector<1x4x256xf32>
    %c0_8 = arith.constant 0 : index
    %c0_9 = arith.constant 0 : index
    %c0_10 = arith.constant 0 : index
    %7 = vector.load %arg3[%c0_8, %c0_9, %c0_10] : memref<1x4x1xf32, #tpu.memory_space<vmem>>, vector<1x4x1xf32>
    %8 = vector.broadcast %7 : vector<1x4x1xf32> to vector<1x4x256xf32>
    %9 = arith.mulf %8, %3 : vector<1x4x256xf32>
    %10 = arith.addf %6, %9 : vector<1x4x256xf32>
    %c0_11 = arith.constant 0 : index
    %c0_12 = arith.constant 0 : index
    %c0_13 = arith.constant 0 : index
    %11 = vector.load %arg4[%c0_11, %c0_12, %c0_13] : memref<1x4x1xf32, #tpu.memory_space<vmem>>, vector<1x4x1xf32>
    %12 = vector.broadcast %11 : vector<1x4x1xf32> to vector<1x4x256xf32>
    %13 = arith.addf %10, %12 : vector<1x4x256xf32>
    %14 = arith.truncf %13 : vector<1x4x256xf32> to vector<1x4x256xbf16>
    %c0_14 = arith.constant 0 : index
    %c0_15 = arith.constant 0 : index
    %15 = vector.load %arg8[%c0_14, %c0_15] : memref<32x4xbf16, #tpu.memory_space<vmem>>, vector<32x4xbf16>
    %c0_16 = arith.constant 0 : index
    %c0_17 = arith.constant 0 : index
    %16 = vector.load %arg9[%c0_16, %c0_17] : memref<4x32xbf16, #tpu.memory_space<vmem>>, vector<4x32xbf16>
    %c0_18 = arith.constant 0 : index
    %c0_19 = arith.constant 0 : index
    %17 = vector.load %arg10[%c0_18, %c0_19] : memref<4x1xf32, #tpu.memory_space<vmem>>, vector<4x1xf32>
    %18 = vector.shape_cast %14 : vector<1x4x256xbf16> to vector<4x256xbf16>
    %cst = arith.constant dense<0.000000e+00> : vector<32x256xf32>
    %19 = tpu.matmul %15, %18, %cst {dimension_numbers = #tpu.dot_dimension_numbers<[1], [0], [0], [1], [0, 0, 1, 1], [], []>} : vector<32x4xbf16>, vector<4x256xbf16>, vector<32x256xf32> -> vector<32x256xf32>
    %c0_20 = arith.constant 0 : index
    %c0_21 = arith.constant 0 : index
    %c0_22 = arith.constant 0 : index
    %20 = vector.load %arg7[%c0_20, %c0_21, %c0_22] : memref<1x32x1xf32, #tpu.memory_space<vmem>>, vector<1x32x1xf32>
    %21 = vector.shape_cast %20 : vector<1x32x1xf32> to vector<32x1xf32>
    %22 = vector.broadcast %21 : vector<32x1xf32> to vector<32x256xf32>
    %23 = arith.addf %19, %22 : vector<32x256xf32>
    %cst_23 = arith.constant 0.000000e+00 : f32
    %24 = vector.broadcast %cst_23 : f32 to vector<32x256xf32>
    %25 = arith.maximumf %23, %24 : vector<32x256xf32>
    %26 = arith.truncf %25 : vector<32x256xf32> to vector<32x256xbf16>
    %cst_24 = arith.constant dense<0.000000e+00> : vector<4x256xf32>
    %27 = tpu.matmul %16, %26, %cst_24 {dimension_numbers = #tpu.dot_dimension_numbers<[1], [0], [0], [1], [0, 0, 1, 1], [], []>} : vector<4x32xbf16>, vector<32x256xbf16>, vector<4x256xf32> -> vector<4x256xf32>
    %28 = vector.broadcast %17 : vector<4x1xf32> to vector<4x256xf32>
    %29 = arith.addf %27, %28 : vector<4x256xf32>
    %30 = vector.shape_cast %3 : vector<1x4x256xf32> to vector<4x256xf32>
    %31 = arith.subf %30, %29 : vector<4x256xf32>
    %32 = arith.mulf %31, %31 : vector<4x256xf32>
    %cst_25 = arith.constant dense<0.000000e+00> : vector<256xf32>
    %33 = vector.multi_reduction <add>, %32, %cst_25 [0] : vector<4x256xf32> to vector<256xf32>
    %34 = vector.shape_cast %33 : vector<256xf32> to vector<1x256xf32>
    %35 = vector.extract_strided_slice %34 {offsets = [0, 0], sizes = [1, 128], strides = [1, 1]} : vector<1x256xf32> to vector<1x128xf32>
    %36 = vector.extract_strided_slice %34 {offsets = [0, 128], sizes = [1, 128], strides = [1, 1]} : vector<1x256xf32> to vector<1x128xf32>
    %37 = arith.addf %35, %36 : vector<1x128xf32>
    %38 = vector.shape_cast %37 : vector<1x128xf32> to vector<1x1x128xf32>
    %c0_26 = arith.constant 0 : index
    %c0_27 = arith.constant 0 : index
    %c0_28 = arith.constant 0 : index
    %39 = vector.load %arg11[%c0_26, %c0_27, %c0_28] : memref<1x1x128xf32, #tpu.memory_space<vmem>>, vector<1x1x128xf32>
    tpu.vector_store %arg11[%c0_26, %c0_27, %c0_28], %38 {strides = array<i32>} : memref<1x1x128xf32, #tpu.memory_space<vmem>>, vector<1x1x128xf32>,
    return
  }
  func.func @transform_0(%arg0: i32, %arg1: i32) -> (i32, i32, i32) {
    %c0_i32 = arith.constant 0 : i32
    %c0_i32_0 = arith.constant 0 : i32
    %c0_i32_1 = arith.constant 0 : i32
    return %arg0, %c0_i32, %c0_i32_0 : i32, i32, i32
  }
  func.func @transform_1(%arg0: i32, %arg1: i32) -> (i32, i32, i32) {
    %c0_i32 = arith.constant 0 : i32
    %c0_i32_0 = arith.constant 0 : i32
    %c0_i32_1 = arith.constant 0 : i32
    return %arg0, %c0_i32, %c0_i32_0 : i32, i32, i32
  }
  func.func @transform_2(%arg0: i32, %arg1: i32) -> (i32, i32, i32) {
    %c0_i32 = arith.constant 0 : i32
    %c0_i32_0 = arith.constant 0 : i32
    %c0_i32_1 = arith.constant 0 : i32
    return %arg0, %c0_i32, %c0_i32_0 : i32, i32, i32
  }
  func.func @transform_3(%arg0: i32, %arg1: i32) -> (i32, i32, i32) {
    %c0_i32 = arith.constant 0 : i32
    %c0_i32_0 = arith.constant 0 : i32
    return %arg0, %c0_i32, %arg1 : i32, i32, i32
  }
  func.func @transform_4(%arg0: i32, %arg1: i32) -> (i32, i32, i32) {
    %c0_i32 = arith.constant 0 : i32
    %c0_i32_0 = arith.constant 0 : i32
    return %arg0, %c0_i32, %arg1 : i32, i32, i32
  }
  func.func @transform_5(%arg0: i32, %arg1: i32) -> (i32, i32, i32) {
    %c0_i32 = arith.constant 0 : i32
    %c0_i32_0 = arith.constant 0 : i32
    %c0_i32_1 = arith.constant 0 : i32
    return %arg0, %c0_i32, %c0_i32_0 : i32, i32, i32
  }
  func.func @transform_6(%arg0: i32, %arg1: i32) -> (i32, i32) {
    %c0_i32 = arith.constant 0 : i32
    %c0_i32_0 = arith.constant 0 : i32
    %c0_i32_1 = arith.constant 0 : i32
    return %c0_i32, %c0_i32_0 : i32, i32
  }
  func.func @transform_7(%arg0: i32, %arg1: i32) -> (i32, i32) {
    %c0_i32 = arith.constant 0 : i32
    %c0_i32_0 = arith.constant 0 : i32
    %c0_i32_1 = arith.constant 0 : i32
    return %c0_i32, %c0_i32_0 : i32, i32
  }
  func.func @transform_8(%arg0: i32, %arg1: i32) -> (i32, i32) {
    %c0_i32 = arith.constant 0 : i32
    %c0_i32_0 = arith.constant 0 : i32
    %c0_i32_1 = arith.constant 0 : i32
    return %c0_i32, %c0_i32_0 : i32, i32
  }
  func.func @transform_9(%arg0: i32, %arg1: i32) -> (i32, i32, i32) {
    %c0_i32 = arith.constant 0 : i32
    %c0_i32_0 = arith.constant 0 : i32
    %c0_i32_1 = arith.constant 0 : i32
    return %arg0, %c0_i32, %c0_i32_0 : i32, i32, i32
  }
}

</mosaic_0001>

<llo_original>
// kernel: tpu_custom_call.1
$region0: #{tpu_custom_call.1}
  #allocation0 [shape = 'u32[]', space=smem, size = 0x4, offset = 0x4, fixed_abs, tag = 'smem constant byte address 0x4 - core index']
  #allocation1 [shape = 'u32[144,128]{1,0:T(1,128)}', space=vmem, size = 0x12000, scoped, tag = 'internal scratch']
  %s0 = inlined_call_operand.vmem [shape: f32[2,4,1], index: 0, kind: input, shape index: {}]
  %s1 = inlined_call_operand.vmem [shape: f32[2,4,1], index: 1, kind: input, shape index: {}]
  %s2 = inlined_call_operand.vmem [shape: f32[2,4,1], index: 2, kind: input, shape index: {}]
  %s3 = inlined_call_operand.vmem [shape: bf16[2,4,256], index: 3, kind: input, shape index: {}]
  %s4 = inlined_call_operand.vmem [shape: bf16[2,4,256], index: 4, kind: input, shape index: {}]
  %s5 = inlined_call_operand.vmem [shape: f32[2,32,1], index: 5, kind: input, shape index: {}]
  %s6 = inlined_call_operand.vmem [shape: bf16[32,4], index: 6, kind: input, shape index: {}]
  %s7 = inlined_call_operand.vmem [shape: bf16[4,32], index: 7, kind: input, shape index: {}]
  %s8 = inlined_call_operand.vmem [shape: f32[4,1], index: 8, kind: input, shape index: {}]
  %s9 = inlined_call_operand.hbm [shape: f32[2,1,128], index: 9, kind: output, shape index: {}]
  %s10 = sld [smem:[#allocation0]]
  $region69: #{tpu_custom_call.1} parent=0
    _
  %s12 = ssub.s32 1, %s10
  %s13 = scalar_select 0, %s12, %s10
  $region1: #{tpu_custom_call.1} parent=0
    #allocation2 [shape = 'u8[1024]{0}', space=vmem, size = 0x400, scoped, tag = 'output window, operand 0']
    #allocation3 [shape = 's32[2]{0}', space=sflag, size = 0x8, scoped, tag = 'scoped memory for tpu_custom_call.1']
    %14 = vsyncpa [#allocation3], 0
    %s15 = scalar_lea.sflag [#allocation3], 1
    %16 = vsyncpa %s15, 0
    loop: start=0, step=1, limit=4
    $region2: #{tpu_custom_call.1} parent=1 // loop_pre_header
      _
    $region3: #{tpu_custom_call.1} parent=1 // loop_header
      %s18 = sphi 0, %s22
      %p19 = scmp.ge.s32.totalorder %s18, 4
      %s25 = sphi 0, %s37
      %s26 = sphi 0, %s33
      %s27 = sphi 0, %s25
      %s28 = sphi 0, %s26
      %s29 = sphi 0, %s27
      %s30 = sphi 0, %s28
      %s40 = sphi 0, %s42
      %s43 = sphi 0, %s40
      %s44 = sphi 0, %s43
      %s60 = sphi 0, %s44
      %s66 = sphi 0, %s68
      %s69 = sphi 0, %s66
      %s70 = sphi 0, %s69
      %s86 = sphi 0, %s70
      %s92 = sphi 0, %s94
      %s95 = sphi 0, %s92
      %s96 = sphi 0, %s95
      %s112 = sphi 0, %s96
      %s120 = sphi 0, %s122
      %s123 = sphi 0, %s120
      %s124 = sphi 0, %s123
      %s140 = sphi 0, %s124
      %s148 = sphi 0, %s150
      %s151 = sphi 0, %s148
      %s152 = sphi 0, %s151
      %s168 = sphi 0, %s152
      %s174 = sphi 0, %s176
      %s177 = sphi 0, %s174
      %s178 = sphi 0, %s177
      %s194 = sphi 0, %s178
      %s198 = sphi 0, %s198
      %s200 = sphi 0, %s198
      %s201 = sphi 0, %s200
      %s215 = sphi 0, %s201
      %s219 = sphi 0, %s219
      %s221 = sphi 0, %s219
      %s222 = sphi 0, %s221
      %s236 = sphi 0, %s222
      %s240 = sphi 0, %s240
      %s242 = sphi 0, %s240
      %s243 = sphi 0, %s242
      %s257 = sphi 0, %s243
      %s263 = sphi 0, %s265
      %s266 = sphi 0, %s263
      %s267 = sphi 0, %s266
      %s283 = sphi 0, %s267
    $region4: #{tpu_custom_call.1} parent=1 // loop_header_branch
      %21 = sbr.rel (%p19) target = $region8
    $region5: #{tpu_custom_call.1} parent=1 // loop_body
      %s23 = ssub.s32 %s18, 1
      %s24 = ssub.s32 %s18, 2
      %s31 = sadd.s32 1, %s26
      %p32 = scmp.ge.s32.totalorder %s31, 1
      %s33 = scalar_select %p32, 0, %s31
      %s34 = sadd.s32 1, %s25
      %s35 = scalar_select %p32, %s34, %s25
      %p36 = scmp.ge.s32.totalorder %s35, 2
      %s37 = scalar_select %p36, 0, %s35
      %s38 = ssub.s32 %s25, %s37
      %p39 = scmp.eq.s32.totalorder %s38, 0
      %s41 = sadd.s32 %s40, 1
      %s42 = scalar_select %p39, %s40, %s41
      %p45 = pneg %p39
      %p46 = scmp.eq.s32.totalorder %s18, 1
      %p47 = por %p45, %p46
      %p48 = scmp.ne.s32.totalorder %s40, %s43
      %p49 = scmp.eq.s32.totalorder %s18, 0
      %p50 = por %p48, %p49
      %p51 = scmp.ne.s32.totalorder %s40, %s43
      %p52 = scmp.eq.s32.totalorder %s23, 1
      %p53 = por %p51, %p52
      %p54 = scmp.ne.s32.totalorder %s43, %s44
      %p55 = scmp.eq.s32.totalorder %s23, 0
      %p56 = por %p54, %p55
      %p57 = scmp.ne.s32.totalorder %s43, %s44
      %p58 = scmp.eq.s32.totalorder %s24, 1
      %p59 = por %p57, %p58
      %p61 = scmp.ne.s32.totalorder %s44, %s60
      %p62 = scmp.eq.s32.totalorder %s24, 0
      %p63 = por %p61, %p62
      %s64 = ssub.s32 %s25, %s37
      %p65 = scmp.eq.s32.totalorder %s64, 0
      %s67 = sadd.s32 %s66, 1
      %s68 = scalar_select %p65, %s66, %s67
      %p71 = pneg %p65
      %p72 = scmp.eq.s32.totalorder %s18, 1
      %p73 = por %p71, %p72
      %p74 = scmp.ne.s32.totalorder %s66, %s69
      %p75 = scmp.eq.s32.totalorder %s18, 0
      %p76 = por %p74, %p75
      %p77 = scmp.ne.s32.totalorder %s66, %s69
      %p78 = scmp.eq.s32.totalorder %s23, 1
      %p79 = por %p77, %p78
      %p80 = scmp.ne.s32.totalorder %s69, %s70
      %p81 = scmp.eq.s32.totalorder %s23, 0
      %p82 = por %p80, %p81
      %p83 = scmp.ne.s32.totalorder %s69, %s70
      %p84 = scmp.eq.s32.totalorder %s24, 1
      %p85 = por %p83, %p84
      %p87 = scmp.ne.s32.totalorder %s70, %s86
      %p88 = scmp.eq.s32.totalorder %s24, 0
      %p89 = por %p87, %p88
      %s90 = ssub.s32 %s25, %s37
      %p91 = scmp.eq.s32.totalorder %s90, 0
      %s93 = sadd.s32 %s92, 1
      %s94 = scalar_select %p91, %s92, %s93
      %p97 = pneg %p91
      %p98 = scmp.eq.s32.totalorder %s18, 1
      %p99 = por %p97, %p98
      %p100 = scmp.ne.s32.totalorder %s92, %s95
      %p101 = scmp.eq.s32.totalorder %s18, 0
      %p102 = por %p100, %p101
      %p103 = scmp.ne.s32.totalorder %s92, %s95
      %p104 = scmp.eq.s32.totalorder %s23, 1
      %p105 = por %p103, %p104
      %p106 = scmp.ne.s32.totalorder %s95, %s96
      %p107 = scmp.eq.s32.totalorder %s23, 0
      %p108 = por %p106, %p107
      %p109 = scmp.ne.s32.totalorder %s95, %s96
      %p110 = scmp.eq.s32.totalorder %s24, 1
      %p111 = por %p109, %p110
      %p113 = scmp.ne.s32.totalorder %s96, %s112
      %p114 = scmp.eq.s32.totalorder %s24, 0
      %p115 = por %p113, %p114
      %s116 = ssub.s32 %s25, %s37
      %s117 = ssub.s32 %s26, %s33
      %s118 = sor.u32 %s116, %s117
      %p119 = scmp.eq.s32.totalorder %s118, 0
      %s121 = sadd.s32 %s120, 1
      %s122 = scalar_select %p119, %s120, %s121
      %p125 = pneg %p119
      %p126 = scmp.eq.s32.totalorder %s18, 1
      %p127 = por %p125, %p126
      %p128 = scmp.ne.s32.totalorder %s120, %s123
      %p129 = scmp.eq.s32.totalorder %s18, 0
      %p130 = por %p128, %p129
      %p131 = scmp.ne.s32.totalorder %s120, %s123
      %p132 = scmp.eq.s32.totalorder %s23, 1
      %p133 = por %p131, %p132
      %p134 = scmp.ne.s32.totalorder %s123, %s124
      %p135 = scmp.eq.s32.totalorder %s23, 0
      %p136 = por %p134, %p135
      %p137 = scmp.ne.s32.totalorder %s123, %s124
      %p138 = scmp.eq.s32.totalorder %s24, 1
      %p139 = por %p137, %p138
      %p141 = scmp.ne.s32.totalorder %s124, %s140
      %p142 = scmp.eq.s32.totalorder %s24, 0
      %p143 = por %p141, %p142
      %s144 = ssub.s32 %s25, %s37
      %s145 = ssub.s32 %s26, %s33
      %s146 = sor.u32 %s144, %s145
      %p147 = scmp.eq.s32.totalorder %s146, 0
      %s149 = sadd.s32 %s148, 1
      %s150 = scalar_select %p147, %s148, %s149
      %p153 = pneg %p147
      %p154 = scmp.eq.s32.totalorder %s18, 1
      %p155 = por %p153, %p154
      %p156 = scmp.ne.s32.totalorder %s148, %s151
      %p157 = scmp.eq.s32.totalorder %s18, 0
      %p158 = por %p156, %p157
      %p159 = scmp.ne.s32.totalorder %s148, %s151
      %p160 = scmp.eq.s32.totalorder %s23, 1
      %p161 = por %p159, %p160
      %p162 = scmp.ne.s32.totalorder %s151, %s152
      %p163 = scmp.eq.s32.totalorder %s23, 0
      %p164 = por %p162, %p163
      %p165 = scmp.ne.s32.totalorder %s151, %s152
      %p166 = scmp.eq.s32.totalorder %s24, 1
      %p167 = por %p165, %p166
      %p169 = scmp.ne.s32.totalorder %s152, %s168
      %p170 = scmp.eq.s32.totalorder %s24, 0
      %p171 = por %p169, %p170
      %s172 = ssub.s32 %s25, %s37
      %p173 = scmp.eq.s32.totalorder %s172, 0
      %s175 = sadd.s32 %s174, 1
      %s176 = scalar_select %p173, %s174, %s175
      %p179 = pneg %p173
      %p180 = scmp.eq.s32.totalorder %s18, 1
      %p181 = por %p179, %p180
      %p182 = scmp.ne.s32.totalorder %s174, %s177
      %p183 = scmp.eq.s32.totalorder %s18, 0
      %p184 = por %p182, %p183
      %p185 = scmp.ne.s32.totalorder %s174, %s177
      %p186 = scmp.eq.s32.totalorder %s23, 1
      %p187 = por %p185, %p186
      %p188 = scmp.ne.s32.totalorder %s177, %s178
      %p189 = scmp.eq.s32.totalorder %s23, 0
      %p190 = por %p188, %p189
      %p191 = scmp.ne.s32.totalorder %s177, %s178
      %p192 = scmp.eq.s32.totalorder %s24, 1
      %p193 = por %p191, %p192
      %p195 = scmp.ne.s32.totalorder %s178, %s194
      %p196 = scmp.eq.s32.totalorder %s24, 0
      %p197 = por %p195, %p196
      %s199 = sadd.s32 %s198, 1
      %p202 = scmp.eq.s32.totalorder %s18, 1
      %p203 = scmp.ne.s32.totalorder %s198, %s200
      %p204 = scmp.eq.s32.totalorder %s18, 0
      %p205 = por %p203, %p204
      %p206 = scmp.ne.s32.totalorder %s198, %s200
      %p207 = scmp.eq.s32.totalorder %s23, 1
      %p208 = por %p206, %p207
      %p209 = scmp.ne.s32.totalorder %s200, %s201
      %p210 = scmp.eq.s32.totalorder %s23, 0
      %p211 = por %p209, %p210
      %p212 = scmp.ne.s32.totalorder %s200, %s201
      %p213 = scmp.eq.s32.totalorder %s24, 1
      %p214 = por %p212, %p213
      %p216 = scmp.ne.s32.totalorder %s201, %s215
      %p217 = scmp.eq.s32.totalorder %s24, 0
      %p218 = por %p216, %p217
      %s220 = sadd.s32 %s219, 1
      %p223 = scmp.eq.s32.totalorder %s18, 1
      %p224 = scmp.ne.s32.totalorder %s219, %s221
      %p225 = scmp.eq.s32.totalorder %s18, 0
      %p226 = por %p224, %p225
      %p227 = scmp.ne.s32.totalorder %s219, %s221
      %p228 = scmp.eq.s32.totalorder %s23, 1
      %p229 = por %p227, %p228
      %p230 = scmp.ne.s32.totalorder %s221, %s222
      %p231 = scmp.eq.s32.totalorder %s23, 0
      %p232 = por %p230, %p231
      %p233 = scmp.ne.s32.totalorder %s221, %s222
      %p234 = scmp.eq.s32.totalorder %s24, 1
      %p235 = por %p233, %p234
      %p237 = scmp.ne.s32.totalorder %s222, %s236
      %p238 = scmp.eq.s32.totalorder %s24, 0
      %p239 = por %p237, %p238
      %s241 = sadd.s32 %s240, 1
      %p244 = scmp.eq.s32.totalorder %s18, 1
      %p245 = scmp.ne.s32.totalorder %s240, %s242
      %p246 = scmp.eq.s32.totalorder %s18, 0
      %p247 = por %p245, %p246
      %p248 = scmp.ne.s32.totalorder %s240, %s242
      %p249 = scmp.eq.s32.totalorder %s23, 1
      %p250 = por %p248, %p249
      %p251 = scmp.ne.s32.totalorder %s242, %s243
      %p252 = scmp.eq.s32.totalorder %s23, 0
      %p253 = por %p251, %p252
      %p254 = scmp.ne.s32.totalorder %s242, %s243
      %p255 = scmp.eq.s32.totalorder %s24, 1
      %p256 = por %p254, %p255
      %p258 = scmp.ne.s32.totalorder %s243, %s257
      %p259 = scmp.eq.s32.totalorder %s24, 0
      %p260 = por %p258, %p259
      %s261 = ssub.s32 %s25, %s37
      %p262 = scmp.eq.s32.totalorder %s261, 0
      %s264 = sadd.s32 %s263, 1
      %s265 = scalar_select %p262, %s263, %s264
      %p268 = pneg %p262
      %p269 = scmp.eq.s32.totalorder %s18, 1
      %p270 = por %p268, %p269
      %p271 = scmp.ne.s32.totalorder %s263, %s266
      %p272 = scmp.eq.s32.totalorder %s18, 0
      %p273 = por %p271, %p272
      %p274 = scmp.ne.s32.totalorder %s263, %s266
      %p275 = scmp.eq.s32.totalorder %s23, 1
      %p276 = por %p274, %p275
      %p277 = scmp.ne.s32.totalorder %s266, %s267
      %p278 = scmp.eq.s32.totalorder %s23, 0
      %p279 = por %p277, %p278
      %p280 = scmp.ne.s32.totalorder %s266, %s267
      %p281 = scmp.eq.s32.totalorder %s24, 1
      %p282 = por %p280, %p281
      %p284 = scmp.ne.s32.totalorder %s267, %s283
      %p285 = scmp.eq.s32.totalorder %s24, 0
      %p286 = por %p284, %p285
      %p287 = scmp.le.s32.totalorder 1, %s18
      %p288 = scmp.lt.s32.totalorder %s18, 3
      %p289 = pnand %p287, %p288
      %p290 = pneg %p289
      // Predicated region
      $region9: #{tpu_custom_call.1} parent=5 // pred_check
        _
      $region10: #{tpu_custom_call.1} parent=5 // pred_check_branch
        %292 = sbr.rel (%p289) target = $region12
      $region11: #{tpu_custom_call.1} parent=5 // pred_region
        %s293 = ssub.s32 %s18, 1
        // Predicated region
        $region13: #{tpu_custom_call.1} parent=11 // pred_check
          %p294 = pneg %p211
        $region14: #{tpu_custom_call.1} parent=11 // pred_check_branch
          %296 = sbr.rel (%p294) target = $region16
        $region15: #{tpu_custom_call.1} parent=11 // pred_region
          _
        $region16: #{tpu_custom_call.1} parent=11 // pred_fallthru
          _
        // Predicated region
        $region17: #{tpu_custom_call.1} parent=11 // pred_check
          %p297 = pneg %p232
        $region18: #{tpu_custom_call.1} parent=11 // pred_check_branch
          %299 = sbr.rel (%p297) target = $region20
        $region19: #{tpu_custom_call.1} parent=11 // pred_region
          _
        $region20: #{tpu_custom_call.1} parent=11 // pred_fallthru
          _
        // Predicated region
        $region21: #{tpu_custom_call.1} parent=11 // pred_check
          %p300 = pneg %p253
        $region22: #{tpu_custom_call.1} parent=11 // pred_check_branch
          %302 = sbr.rel (%p300) target = $region24
        $region23: #{tpu_custom_call.1} parent=11 // pred_region
          _
        $region24: #{tpu_custom_call.1} parent=11 // pred_fallthru
          _
      $region12: #{tpu_custom_call.1} parent=5 // pred_fallthru
        _
      %p303 = scmp.lt.s32.totalorder %s18, 2
      // Predicated region
      $region25: #{tpu_custom_call.1} parent=5 // pred_check
        %p304 = pneg %p303
      $region26: #{tpu_custom_call.1} parent=5 // pred_check_branch
        %306 = sbr.rel (%p304) target = $region28
      $region27: #{tpu_custom_call.1} parent=5 // pred_region
        // Predicated region
        $region29: #{tpu_custom_call.1} parent=27 // pred_check
          %p307 = pneg %p50
        $region30: #{tpu_custom_call.1} parent=27 // pred_check_branch
          %309 = sbr.rel (%p307) target = $region32
        $region31: #{tpu_custom_call.1} parent=27 // pred_region
          %p310 = scmp.lt.s32.totalorder %s25, 1
          %s311 = scalar_select %p310, %s25, 1
          %s312 = smul.addr %s311, 4
          %s313 = scalar_lea.vmem %s0, %s312
        $region32: #{tpu_custom_call.1} parent=27 // pred_fallthru
          _
        // Predicated region
        $region33: #{tpu_custom_call.1} parent=27 // pred_check
          %p314 = pneg %p76
        $region34: #{tpu_custom_call.1} parent=27 // pred_check_branch
          %316 = sbr.rel (%p314) target = $region36
        $region35: #{tpu_custom_call.1} parent=27 // pred_region
          %p317 = scmp.lt.s32.totalorder %s25, 1
          %s318 = scalar_select %p317, %s25, 1
          %s319 = smul.addr %s318, 4
          %s320 = scalar_lea.vmem %s1, %s319
        $region36: #{tpu_custom_call.1} parent=27 // pred_fallthru
          _
        // Predicated region
        $region37: #{tpu_custom_call.1} parent=27 // pred_check
          %p321 = pneg %p102
        $region38: #{tpu_custom_call.1} parent=27 // pred_check_branch
          %323 = sbr.rel (%p321) target = $region40
        $region39: #{tpu_custom_call.1} parent=27 // pred_region
          %p324 = scmp.lt.s32.totalorder %s25, 1
          %s325 = scalar_select %p324, %s25, 1
          %s326 = smul.addr %s325, 4
          %s327 = scalar_lea.vmem %s2, %s326
        $region40: #{tpu_custom_call.1} parent=27 // pred_fallthru
          _
        // Predicated region
        $region41: #{tpu_custom_call.1} parent=27 // pred_check
          %p328 = pneg %p130
        $region42: #{tpu_custom_call.1} parent=27 // pred_check_branch
          %330 = sbr.rel (%p328) target = $region44
        $region43: #{tpu_custom_call.1} parent=27 // pred_region
          %s331 = smul.u32 2, %s26
          %p332 = scmp.lt.s32.totalorder %s25, 1
          %s333 = scalar_select %p332, %s25, 1
          %p334 = scmp.lt.s32.totalorder %s331, 1
          %s335 = scalar_select %p334, %s331, 1
          %s336 = smul.addr %s333, 2
          %s337 = sadd.s32 %s335, %s336
          %s338 = smul.addr %s337, 2
          %s339 = scalar_lea.vmem %s3, %s338
          %s340 = smul.u32 2, %s26
        $region44: #{tpu_custom_call.1} parent=27 // pred_fallthru
          _
        // Predicated region
        $region45: #{tpu_custom_call.1} parent=27 // pred_check
          %p341 = pneg %p158
        $region46: #{tpu_custom_call.1} parent=27 // pred_check_branch
          %343 = sbr.rel (%p341) target = $region48
        $region47: #{tpu_custom_call.1} parent=27 // pred_region
          %s344 = smul.u32 2, %s26
          %p345 = scmp.lt.s32.totalorder %s25, 1
          %s346 = scalar_select %p345, %s25, 1
          %p347 = scmp.lt.s32.totalorder %s344, 1
          %s348 = scalar_select %p347, %s344, 1
          %s349 = smul.addr %s346, 2
          %s350 = sadd.s32 %s348, %s349
          %s351 = smul.addr %s350, 2
          %s352 = scalar_lea.vmem %s4, %s351
          %s353 = smul.u32 2, %s26
        $region48: #{tpu_custom_call.1} parent=27 // pred_fallthru
          _
        // Predicated region
        $region49: #{tpu_custom_call.1} parent=27 // pred_check
          %p354 = pneg %p184
        $region50: #{tpu_custom_call.1} parent=27 // pred_check_branch
          %356 = sbr.rel (%p354) target = $region52
        $region51: #{tpu_custom_call.1} parent=27 // pred_region
          %p357 = scmp.lt.s32.totalorder %s25, 1
          %s358 = scalar_select %p357, %s25, 1
          %s359 = smul.addr %s358, 4
          %s360 = smul.addr %s359, 8
          %s361 = scalar_lea.vmem %s5, %s360
        $region52: #{tpu_custom_call.1} parent=27 // pred_fallthru
          _
      $region28: #{tpu_custom_call.1} parent=5 // pred_fallthru
        _
      %p362 = scmp.le.s32.totalorder 1, %s18
      %p363 = scmp.lt.s32.totalorder %s18, 3
      %p364 = pnand %p362, %p363
      %p365 = pneg %p364
      // Predicated region
      $region53: #{tpu_custom_call.1} parent=5 // pred_check
        _
      $region54: #{tpu_custom_call.1} parent=5 // pred_check_branch
        %367 = sbr.rel (%p364) target = $region56
      $region55: #{tpu_custom_call.1} parent=5 // pred_region
        %s368 = ssub.s32 %s18, 1
        %p369 = scmp.lt.s32.totalorder %s27, 1
        %s370 = scalar_select %p369, %s27, 1
        %s371 = smul.addr %s370, 4
        %s372 = scalar_lea.vmem %s0, %s371
        %p373 = pneg %p56
        %p374 = pneg %p53
        %p375 = scmp.lt.s32.totalorder %s27, 1
        %s376 = scalar_select %p375, %s27, 1
        %s377 = smul.addr %s376, 4
        %s378 = scalar_lea.vmem %s1, %s377
        %p379 = pneg %p82
        %p380 = pneg %p79
        %p381 = scmp.lt.s32.totalorder %s27, 1
        %s382 = scalar_select %p381, %s27, 1
        %s383 = smul.addr %s382, 4
        %s384 = scalar_lea.vmem %s2, %s383
        %p385 = pneg %p108
        %p386 = pneg %p105
        %s387 = smul.u32 2, %s28
        %p388 = scmp.lt.s32.totalorder %s27, 1
        %s389 = scalar_select %p388, %s27, 1
        %p390 = scmp.lt.s32.totalorder %s387, 1
        %s391 = scalar_select %p390, %s387, 1
        %s392 = smul.addr %s389, 2
        %s393 = sadd.s32 %s391, %s392
        %s394 = smul.addr %s393, 2
        %s395 = scalar_lea.vmem %s3, %s394
        %p396 = pneg %p136
        %p397 = pneg %p133
        %s398 = smul.u32 2, %s28
        %p399 = scmp.lt.s32.totalorder %s27, 1
        %s400 = scalar_select %p399, %s27, 1
        %p401 = scmp.lt.s32.totalorder %s398, 1
        %s402 = scalar_select %p401, %s398, 1
        %s403 = smul.addr %s400, 2
        %s404 = sadd.s32 %s402, %s403
        %s405 = smul.addr %s404, 2
        %s406 = scalar_lea.vmem %s4, %s405
        %p407 = pneg %p164
        %p408 = pneg %p161
        %p409 = scmp.lt.s32.totalorder %s27, 1
        %s410 = scalar_select %p409, %s27, 1
        %s411 = smul.addr %s410, 4
        %s412 = smul.addr %s411, 8
        %s413 = scalar_lea.vmem %s5, %s412
        %p414 = pneg %p190
        %p415 = pneg %p187
        %p416 = pneg %p211
        %p417 = pneg %p208
        %p418 = pneg %p232
        %p419 = pneg %p229
        %p420 = pneg %p253
        %p421 = pneg %p250
        %p422 = pneg %p279
        %p423 = pneg %p276
        %s424 = sand.u32 %s266, 1
        %s425 = scalar_lea.sflag [#allocation3], %s424
        %s426 = sand.u32 %s266, 1
        %s427 = scalar_lea.vmem [#allocation2], %s426
        %p428 = scmp.lt.s32.totalorder %s27, 1
        %s429 = scalar_select %p428, %s27, 1
        %s430 = smul.addr %s429, 4
        %s431 = scalar_lea.vmem %s0, %s430
        %p432 = scmp.lt.s32.totalorder %s27, 1
        %s433 = scalar_select %p432, %s27, 1
        %s434 = smul.addr %s433, 4
        %s435 = scalar_lea.vmem %s1, %s434
        %p436 = scmp.lt.s32.totalorder %s27, 1
        %s437 = scalar_select %p436, %s27, 1
        %s438 = smul.addr %s437, 4
        %s439 = scalar_lea.vmem %s2, %s438
        %s440 = smul.u32 2, %s28
        %p441 = scmp.lt.s32.totalorder %s27, 1
        %s442 = scalar_select %p441, %s27, 1
        %p443 = scmp.lt.s32.totalorder %s440, 1
        %s444 = scalar_select %p443, %s440, 1
        %s445 = smul.addr %s442, 2
        %s446 = sadd.s32 %s444, %s445
        %s447 = smul.addr %s446, 2
        %s448 = scalar_lea.vmem %s3, %s447
        %s449 = smul.u32 2, %s28
        %s450 = smul.u32 2, %s28
        %p451 = scmp.lt.s32.totalorder %s27, 1
        %s452 = scalar_select %p451, %s27, 1
        %p453 = scmp.lt.s32.totalorder %s450, 1
        %s454 = scalar_select %p453, %s450, 1
        %s455 = smul.addr %s452, 2
        %s456 = sadd.s32 %s454, %s455
        %s457 = smul.addr %s456, 2
        %s458 = scalar_lea.vmem %s4, %s457
        %s459 = smul.u32 2, %s28
        %p460 = scmp.lt.s32.totalorder %s27, 1
        %s461 = scalar_select %p460, %s27, 1
        %s462 = smul.addr %s461, 4
        %s463 = smul.addr %s462, 8
        %s464 = scalar_lea.vmem %s5, %s463
        %v466 = vld [vmem:[%s448] sm:$0xf]
        %v467 = vunpack.c.l.bf16 %v466
        %v468 = vld [vmem:[%s458] sm:$0xf]
        %v469 = vunpack.c.l.bf16 %v468
        %v470 = vld [vmem:[%s431] sm:$0xf]
        %472 = vset.pattern.permute.xlu0 0
        %473 = vperm.xlu0 %472, %v470
        %v474 = vpop.permute.xlu0 %473
        %v477 = vcombine.high %v467, %v467
        %v479 = vmul.f32 %v474, %v467
        %v480 = vmul.f32 %v474, %v477
        %v481 = vld [vmem:[%s435] sm:$0xf]
        %483 = vset.pattern.permute.xlu0 0
        %484 = vperm.xlu0 %483, %v481
        %v485 = vpop.permute.xlu0 %484
        %v488 = vcombine.high %v469, %v469
        %v490 = vmul.f32 %v485, %v469
        %v491 = vmul.f32 %v485, %v488
        %v492 = vadd.f32 %v479, %v490
        %v493 = vadd.f32 %v480, %v491
        %v494 = vld [vmem:[%s439] sm:$0xf]
        %496 = vset.pattern.permute.xlu0 0
        %497 = vperm.xlu0 %496, %v494
        %v498 = vpop.permute.xlu0 %497
        %v500 = vadd.f32 %v492, %v498
        %v501 = vadd.f32 %v493, %v498
        %v502 = vpack.c.bf16 %v500, %v500
        %v503 = vpack.c.bf16 %v501, %v501
        %v504 = vld [vmem:[%s6] sm:$0xf]
        %v505 = vld [vmem:[%s6 + $0x4] sm:$0xf]
        %v506 = vld [vmem:[%s6 + $0x8] sm:$0xf]
        %v507 = vld [vmem:[%s6 + $0xc] sm:$0xf]
        %v508 = vld [vmem:[%s7] sm:$0x3]
        %v509 = vld [vmem:[%s8] sm:$0xf]
        %v510 = vld [vmem:[%s464] sm:$0xff]
        %v511 = vld [vmem:[%s464 + $0x8] sm:$0xff]
        %v512 = vld [vmem:[%s464 + $0x10] sm:$0xff]
        %v513 = vld [vmem:[%s464 + $0x18] sm:$0xff]
        %515 = vset.pattern.permute.xlu0 0
        %516 = vperm.xlu0 %515, %v510
        %v517 = vpop.permute.xlu0 %516
        %520 = vset.pattern.permute.xlu0 0
        %521 = vperm.xlu0 %520, %v511
        %v522 = vpop.permute.xlu0 %521
        %525 = vset.pattern.permute.xlu0 0
        %526 = vperm.xlu0 %525, %v512
        %v527 = vpop.permute.xlu0 %526
        %530 = vset.pattern.permute.xlu0 0
        %531 = vperm.xlu0 %530, %v513
        %v532 = vpop.permute.xlu0 %531
        %v538 = vunpack.c.l.b16 %v504
        %v539 = vunpack.c.l.b16 %v505
        %v540 = vunpack.c.l.b16 %v506
        %v541 = vunpack.c.l.b16 %v507
        %v542 = vpack.c.b16 %v539, %v538
        %v543 = vpack.c.b16 %v541, %v540
        %vm544 = vcmask 31744
        %v546 = vsel %vm544, %v542, 0
        %v549 = vsel %vm544, %v543, 0
        %vm551 = vcmask 1041408
        %v553 = vsel %vm551, %v502, 0
        %v556 = vsel %vm551, %v503, 0
        %558 = vmatprep.subr.bf16.mxu0 %v556
        %559 = vmatpush1.bf16.msra.mxu0 %v553
        %560 = vmatprep.subr.bf16.mxu0 0
        %561 = vmatpush1.bf16.msra.mxu0 0
        %562 = vmatprep.subr.bf16.mxu0 0
        %563 = vmatpush1.bf16.msra.mxu0 0
        %564 = vmatprep.subr.bf16.mxu0 0
        %565 = vmatpush1.bf16.msra.mxu0 0
        %566 = vmatprep.subr.bf16.mxu0 0
        %567 = vmatpush1.bf16.msra.mxu0 0
        %568 = vmatprep.subr.bf16.mxu0 0
        %569 = vmatpush1.bf16.msra.mxu0 0
        %570 = vmatprep.subr.bf16.mxu0 0
        %571 = vmatpush1.bf16.msra.mxu0 0
        %572 = vmatprep.subr.bf16.mxu0 0
        %573 = vmatpush1.bf16.msra.mxu0 0
        %574 = vmatprep.subr.bf16.mxu0 0
        %575 = vmatpush1.bf16.msra.mxu0 0
        %576 = vmatprep.subr.bf16.mxu0 0
        %577 = vmatpush1.bf16.msra.mxu0 0
        %578 = vmatprep.subr.bf16.mxu0 0
        %579 = vmatpush1.bf16.msra.mxu0 0
        %580 = vmatprep.subr.bf16.mxu0 0
        %581 = vmatpush1.bf16.msra.mxu0 0
        %582 = vmatprep.subr.bf16.mxu0 0
        %583 = vmatpush1.bf16.msra.mxu0 0
        %584 = vmatprep.subr.bf16.mxu0 0
        %585 = vmatpush1.bf16.msra.mxu0 0
        %586 = vmatprep.subr.bf16.mxu0 0
        %587 = vmatpush1.bf16.msra.mxu0 0
        %588 = vmatprep.subr.bf16.mxu0 0
        %589 = vmatpush1.bf16.msra.mxu0 0
        %590 = vmatprep.mubr.bf16.mxu0 0
        %591 = vmatmul.mubr.bf16.gmra.mrb[0].mxu0 %v546
        %v592 = vpop.f32.mrb[0].mxu0
        %v593 = vadd.f32 %v517, %v592
        %v594 = vpop.f32.mrb[0].mxu0
        %v595 = vadd.f32 %v517, %v594
        %v596 = vpop.f32.mrb[0].mxu0
        %v597 = vadd.f32 %v522, %v596
        %v598 = vpop.f32.mrb[0].mxu0
        %v599 = vadd.f32 %v522, %v598
        %600 = vmatprep.mubr.bf16.mxu0 0
        %601 = vmatmul.mubr.bf16.gmra.mrb[0].mxu0 %v549
        %v602 = vpop.f32.mrb[0].mxu0
        %v603 = vadd.f32 %v527, %v602
        %v604 = vpop.f32.mrb[0].mxu0
        %v605 = vadd.f32 %v527, %v604
        %v606 = vpop.f32.mrb[0].mxu0
        %v607 = vadd.f32 %v532, %v606
        %v608 = vpop.f32.mrb[0].mxu0
        %v609 = vadd.f32 %v532, %v608
        %610 = vdwg.mxu0
        %v611 = vmax.f32 %v593, 0.0
        %v612 = vmax.f32 %v595, 0.0
        %v613 = vmax.f32 %v597, 0.0
        %v614 = vmax.f32 %v599, 0.0
        %v615 = vmax.f32 %v603, 0.0
        %v616 = vmax.f32 %v605, 0.0
        %v617 = vmax.f32 %v607, 0.0
        %v618 = vmax.f32 %v609, 0.0
        %v619 = vpack.c.bf16 %v613, %v611
        %v620 = vpack.c.bf16 %v614, %v612
        %v621 = vpack.c.bf16 %v617, %v615
        %v622 = vpack.c.bf16 %v618, %v616
        %624 = vset.pattern.permute.xlu0 0
        %625 = vperm.xlu0 %624, %v509
        %v626 = vpop.permute.xlu0 %625
        %vm628 = vcmask 261120
        %v630 = vsel %vm628, %v508, 0
        %632 = vmatprep.subr.bf16.mxu0 %v620
        %633 = vmatpush1.bf16.msra.mxu0 %v619
        %634 = vmatprep.subr.bf16.mxu0 %v622
        %635 = vmatpush1.bf16.msra.mxu0 %v621
        %636 = vmatprep.subr.bf16.mxu0 0
        %637 = vmatpush1.bf16.msra.mxu0 0
        %638 = vmatprep.subr.bf16.mxu0 0
        %639 = vmatpush1.bf16.msra.mxu0 0
        %640 = vmatprep.subr.bf16.mxu0 0
        %641 = vmatpush1.bf16.msra.mxu0 0
        %642 = vmatprep.subr.bf16.mxu0 0
        %643 = vmatpush1.bf16.msra.mxu0 0
        %644 = vmatprep.subr.bf16.mxu0 0
        %645 = vmatpush1.bf16.msra.mxu0 0
        %646 = vmatprep.subr.bf16.mxu0 0
        %647 = vmatpush1.bf16.msra.mxu0 0
        %648 = vmatprep.subr.bf16.mxu0 0
        %649 = vmatpush1.bf16.msra.mxu0 0
        %650 = vmatprep.subr.bf16.mxu0 0
        %651 = vmatpush1.bf16.msra.mxu0 0
        %652 = vmatprep.subr.bf16.mxu0 0
        %653 = vmatpush1.bf16.msra.mxu0 0
        %654 = vmatprep.subr.bf16.mxu0 0
        %655 = vmatpush1.bf16.msra.mxu0 0
        %656 = vmatprep.subr.bf16.mxu0 0
        %657 = vmatpush1.bf16.msra.mxu0 0
        %658 = vmatprep.subr.bf16.mxu0 0
        %659 = vmatpush1.bf16.msra.mxu0 0
        %660 = vmatprep.subr.bf16.mxu0 0
        %661 = vmatpush1.bf16.msra.mxu0 0
        %662 = vmatprep.subr.bf16.mxu0 0
        %663 = vmatpush1.bf16.msra.mxu0 0
        %664 = vmatprep.mubr.bf16.mxu0 0
        %665 = vmatmul.mubr.bf16.gmra.mrb[0].mxu0 %v630
        %v666 = vpop.f32.mrb[0].mxu0
        %v667 = vadd.f32 %v626, %v666
        %v668 = vpop.f32.mrb[0].mxu0
        %v669 = vadd.f32 %v626, %v668
        %v670 = vpop.f32.mrb[0].mxu0
        %v671 = vpop.f32.mrb[0].mxu0
        %672 = vdwg.mxu0
        %v675 = vcombine.low %v667, %v669
        %v677 = vsub.f32 %v469, %v675
        %v678 = vmul.f32 %v677, %v677
        %v680 = vcombine.high %v678, %v678
        %vm682 = vcmask 1043456
        %v683 = vsel %vm682, %v678, 0.0
        %v684 = vrot.slane %v683, 4
        %v685 = vadd.f32 %v683, %v684
        %v686 = vrot.slane %v685, 2
        %v687 = vadd.f32 %v685, %v686
        %v688 = vrot.slane %v687, 1
        %v689 = vadd.f32 %v687, %v688
        %v690 = vsel %vm682, %v680, 0.0
        %v691 = vrot.slane %v690, 4
        %v692 = vadd.f32 %v690, %v691
        %v693 = vrot.slane %v692, 2
        %v694 = vadd.f32 %v692, %v693
        %v695 = vrot.slane %v694, 1
        %v696 = vadd.f32 %v694, %v695
        %v697 = vadd.f32 %v689, %v696
        %698 = vst [vmem:[%s427] sm:$0x1] %v697
        %s699 = sand.u32 %s266, 1
        %s700 = scalar_lea.sflag [#allocation3], %s699
        %s701 = sand.u32 %s266, 1
        %s702 = scalar_lea.vmem [#allocation2], %s701
        // Predicated region
        $region57: #{tpu_custom_call.1} parent=55 // pred_check
          %p703 = pneg %p276
        $region58: #{tpu_custom_call.1} parent=55 // pred_check_branch
          %705 = sbr.rel (%p703) target = $region60
        $region59: #{tpu_custom_call.1} parent=55 // pred_region
          %s707 = ssub.s32 16, 16
          %708 = vsyncadd %s700, %s707
          %s709 = smul.addr %s27, 16
          %s710 = scalar_lea.hbm %s9, %s709
          %s712 = sshll.u32 %s702, 4
          %s713 = int_to_ptr.vmem [resolvable:$true] %s712
          %715 = dma.vmem_to_hbm [thread:$0]  %s713, 16, %s710, %s700
        $region60: #{tpu_custom_call.1} parent=55 // pred_fallthru
          _
      $region56: #{tpu_custom_call.1} parent=5 // pred_fallthru
        _
      %p716 = scmp.le.s32.totalorder 2, %s18
      // Predicated region
      $region61: #{tpu_custom_call.1} parent=5 // pred_check
        %p717 = pneg %p716
      $region62: #{tpu_custom_call.1} parent=5 // pred_check_branch
        %719 = sbr.rel (%p717) target = $region64
      $region63: #{tpu_custom_call.1} parent=5 // pred_region
        %s720 = ssub.s32 %s18, 2
        // Predicated region
        $region65: #{tpu_custom_call.1} parent=63 // pred_check
          %p721 = pneg %p282
        $region66: #{tpu_custom_call.1} parent=63 // pred_check_branch
          %723 = sbr.rel (%p721) target = $region68
        $region67: #{tpu_custom_call.1} parent=63 // pred_region
          %s724 = sand.u32 %s267, 1
          %s725 = scalar_lea.sflag [#allocation3], %s724
          %s726 = sand.u32 %s267, 1
          %s727 = scalar_lea.vmem [#allocation2], %s726
          %728 = dma.done %s725, 16
        $region68: #{tpu_custom_call.1} parent=63 // pred_fallthru
          _
      $region64: #{tpu_custom_call.1} parent=5 // pred_fallthru
        _
    $region6: #{tpu_custom_call.1} parent=1 // loop_footer
      %s22 = sadd.s32 1, %s18
    $region7: #{tpu_custom_call.1} parent=1 // loop_footer_branch
      %17 = sbr.rel target = $region3
    $region8: #{tpu_custom_call.1} parent=1 // loop_exit
      _
    %729 = vsyncpa [#allocation3], 1
    %s730 = scalar_lea.sflag [#allocation3], 1
    %731 = vsyncpa %s730, 1

</llo_original>
